<compile_context>
chip_gen: v5e
topology: v5e:2x2
jax: 0.10.0
libtpu: 0.0.40
codegen_flags: <defaults>
</compile_context>

<pallas_src>
import functools

import jax
import jax.numpy as jnp
from jax.experimental import pallas as pl
from jax.experimental.pallas import tpu as pltpu

VOCAB_SIZE = 65        # Tiny Shakespeare character-level vocab size
LANE = 128
NEG_INF = -1e30


def _round_up(x, m):
    return ((x + m - 1) // m) * m


def pad_embedding(emb):
    """Zero-pad the (V, V) table to lane-dense (Vp, Vp) and bake the vocab mask
    into columns >= V (-1e30).  Call once at model init (hoisted out of the
    per-forward path)."""
    V = emb.shape[0]
    Vp = _round_up(V, LANE)
    emb_pad = jnp.zeros((Vp, Vp), jnp.float32)
    emb_pad = emb_pad.at[:, V:].set(NEG_INF)
    emb_pad = emb_pad.at[:V, :V].set(emb.astype(jnp.float32))
    return emb_pad


def _gather_logits(idx_col, emb, block_n, vp):
    """Embedding lookup as a one-hot matmul on the MXU.  The 0/1 LHS is exact
    in bf16 and HIGHEST reconstructs the f32 table, so this is an exact gather
    up to f32 rounding."""
    cols = jax.lax.broadcasted_iota(jnp.int32, (block_n, vp), 1)
    onehot = (cols == idx_col).astype(jnp.float32)
    logits = jnp.dot(onehot, emb,
                     preferred_element_type=jnp.float32,
                     precision=jax.lax.Precision.HIGHEST)
    return cols, logits


def _per_row_loss(cols, logits, tgt_col, row_valid):
    """Per-row cross entropy.  Padded columns hold -1e30 (baked into the
    table), so exp(logits - m) underflows to 0 there -- no column masking."""
    m = jnp.max(logits, axis=-1, keepdims=True)
    se = jnp.sum(jnp.exp(logits - m), axis=-1, keepdims=True)
    lse = m + jnp.log(se)
    # Fused target gather (no second materialized one-hot).
    tgt_logit = jnp.sum(jnp.where(cols == tgt_col, logits, 0.0),
                        axis=-1, keepdims=True)
    return jnp.where(row_valid, lse - tgt_logit, 0.0)


def _row_valid(block_n, n_rows):
    row = (jax.lax.broadcasted_iota(jnp.int32, (block_n, 1), 0)
           + pl.program_id(0) * block_n)
    return row < n_rows


def _kernel_logits_loss(tok_ref, emb_ref, logits_ref, loss_ref, *, n_rows):
    block_n = tok_ref.shape[0]
    vp = emb_ref.shape[1]
    cols, logits = _gather_logits(tok_ref[:, 0:1], emb_ref[...], block_n, vp)
    logits_ref[...] = logits
    loss_ref[...] = _per_row_loss(cols, logits, tok_ref[:, 1:2],
                                  _row_valid(block_n, n_rows))


def _kernel_loss_only(tok_ref, emb_ref, loss_ref, *, n_rows):
    block_n = tok_ref.shape[0]
    vp = emb_ref.shape[1]
    cols, logits = _gather_logits(tok_ref[:, 0:1], emb_ref[...], block_n, vp)
    loss_ref[...] = _per_row_loss(cols, logits, tok_ref[:, 1:2],
                                  _row_valid(block_n, n_rows))


def _kernel_logits_only(idx_ref, emb_ref, logits_ref):
    block_n = idx_ref.shape[0]
    vp = emb_ref.shape[1]
    _, logits = _gather_logits(idx_ref[:, 0:1], emb_ref[...], block_n, vp)
    logits_ref[...] = logits


def bigram_forward(idx, emb_pad, vocab_size, target=None, *, block_n=2048,
                   return_logits=True, pad_logits=False):
    """Mirrors BigramLanguageModel.forward.

    Returns (logits, loss).  logits is (B, T, V) by default, (B, T, 128) if
    pad_logits=True (consumer must ignore columns >= V), or None if
    return_logits=False (loss-only fast path; requires target)."""
    B, T = idx.shape
    V = vocab_size
    Vp = emb_pad.shape[1]
    N = B * T

    # Large row tile (HBM-writeback / per-step-overhead bound), multiple of 8,
    # but small enough that the grid keeps >= 2 steps for megacore sharding.
    block_n = max(8, min(block_n, _round_up((N + 1) // 2, 8)))
    n_pad = _round_up(N, block_n)
    grid = (n_pad // block_n,)

    idx_flat = jnp.pad(idx.reshape(N).astype(jnp.int32), (0, n_pad - N))

    compiler_params = pltpu.CompilerParams(
        dimension_semantics=("parallel",),       # disjoint output tiles
        vmem_limit_bytes=32 * 1024 * 1024,
    )

    emb_spec = pl.BlockSpec((Vp, Vp), lambda i: (0, 0))          # resident, 64 KiB
    logits_spec = pl.BlockSpec((block_n, Vp), lambda i: (i, 0))  # lane-dense
    loss_spec = pl.BlockSpec((block_n, 1), lambda i: (i, 0))

    def finish_logits(logits_pad):
        if pad_logits:
            # Lane-dense slab; only a row-prefix slice (free when n_pad == N).
            return logits_pad[:N].reshape(B, T, Vp)
        return logits_pad[:N, :V].reshape(B, T, V)

    if target is None:
        logits_pad = pl.pallas_call(
            _kernel_logits_only,
            grid=grid,
            out_shape=jax.ShapeDtypeStruct((n_pad, Vp), jnp.float32),
            in_specs=[pl.BlockSpec((block_n, 1), lambda i: (i, 0)), emb_spec],
            out_specs=logits_spec,
            compiler_params=compiler_params,
        )(idx_flat.reshape(n_pad, 1), emb_pad)
        return finish_logits(logits_pad), None

    tgt_flat = jnp.pad(target.reshape(N).astype(jnp.int32), (0, n_pad - N))
    tokens = jnp.stack([idx_flat, tgt_flat], axis=-1)            # (n_pad, 2)

    if not return_logits:
        # Loss-only: drop the logits writeback entirely (it is ~99% of the
        # HBM bytes in the combined path).
        per_row = pl.pallas_call(
            functools.partial(_kernel_loss_only, n_rows=N),
            grid=grid,
            out_shape=jax.ShapeDtypeStruct((n_pad, 1), jnp.float32),
            in_specs=[pl.BlockSpec((block_n, 2), lambda i: (i, 0)), emb_spec],
            out_specs=loss_spec,
            compiler_params=compiler_params,
        )(tokens, emb_pad)
        return None, jnp.sum(per_row) / N

    logits_pad, per_row = pl.pallas_call(
        functools.partial(_kernel_logits_loss, n_rows=N),
        grid=grid,
        out_shape=(
            jax.ShapeDtypeStruct((n_pad, Vp), jnp.float32),
            jax.ShapeDtypeStruct((n_pad, 1), jnp.float32),
        ),
        in_specs=[pl.BlockSpec((block_n, 2), lambda i: (i, 0)), emb_spec],
        out_specs=(logits_spec, loss_spec),
        compiler_params=compiler_params,
    )(tokens, emb_pad)
    # Padded rows were zeroed in-kernel; divide by the true N (mean reduction).
    return finish_logits(logits_pad), jnp.sum(per_row) / N


class BigramLanguageModel:
    """Thin stateful wrapper so the padded table is built once (hoisted)."""

    def __init__(self, vocab_size, emb_weight):
        self.vocab_size = vocab_size
        self.emb = emb_weight.astype(jnp.float32)
        self.emb_pad = pad_embedding(self.emb)   # built once, reused per call

    def forward(self, idx, target=None, **kw):
        return bigram_forward(idx, self.emb_pad, self.vocab_size, target, **kw)

    # TODO(synk): generate() (multinomial sampling loop) is host-side
    # autoregressive control flow, not a kernel hot path; omitted.


def _reference_forward(idx, emb, target):
    logits = emb[idx]                                     # (B, T, V)
    V = emb.shape[0]
    lf = logits.reshape(-1, V).astype(jnp.float32)
    tf = target.reshape(-1)
    lse = jax.nn.logsumexp(lf, axis=-1)
    tgt_logit = jnp.take_along_axis(lf, tf[:, None], axis=-1)[:, 0]
    return logits, jnp.mean(lse - tgt_logit)


if __name__ == "__main__":
    key = jax.random.PRNGKey(0)
    k_emb, k_idx, k_tgt, k_idx2, k_tgt2 = jax.random.split(key, 5)

    V = VOCAB_SIZE
    # nn.Embedding default init ~ N(0, 1)
    emb = jax.random.normal(k_emb, (V, V), dtype=jnp.float32)
    model = BigramLanguageModel(V, emb)

    # --- shape 1: (B, T) = (2, 8); n_pad == N, grid has 2 steps -------------
    B, T = 2, 8
    idx = jax.random.randint(k_idx, (B, T), 0, V, dtype=jnp.int32)
    target = jax.random.randint(k_tgt, (B, T), 0, V, dtype=jnp.int32)

    logits, loss = model.forward(idx, target)                    # training path
    logits_inf, loss_inf = model.forward(idx)                    # inference path
    _, loss_only = model.forward(idx, target, return_logits=False)  # loss-only

    # --- shape 2: (B, T) = (3, 7); exercises padded-row masking -------------
    B2, T2 = 3, 7
    idx2 = jax.random.randint(k_idx2, (B2, T2), 0, V, dtype=jnp.int32)
    target2 = jax.random.randint(k_tgt2, (B2, T2), 0, V, dtype=jnp.int32)
    logits2, loss2 = model.forward(idx2, target2)

    jax.block_until_ready((logits, loss, logits_inf, loss_only, logits2, loss2))

    ref_logits, ref_loss = _reference_forward(idx, emb, target)
    ref_logits2, ref_loss2 = _reference_forward(idx2, emb, target2)

    assert logits.shape == (B, T, V) and logits.dtype == jnp.float32
    assert loss_inf is None
    assert jnp.allclose(logits, ref_logits, atol=1e-5, rtol=1e-5)
    assert jnp.allclose(logits_inf, ref_logits, atol=1e-5, rtol=1e-5)
    assert jnp.allclose(loss, ref_loss, atol=1e-5, rtol=1e-5)
    assert jnp.allclose(loss_only, ref_loss, atol=1e-5, rtol=1e-5)
    assert logits2.shape == (B2, T2, V)
    assert jnp.allclose(logits2, ref_logits2, atol=1e-5, rtol=1e-5)
    assert jnp.allclose(loss2, ref_loss2, atol=1e-5, rtol=1e-5)

    print("KERNEL_OK")
</pallas_src>

<mosaic_0001>
module attributes {stable_mosaic.version = 11 : i64} {
  func.func @_kernel_logits_loss(%arg0: i32, %arg1: memref<8x2xi32, #tpu.memory_space<vmem>>, %arg2: memref<128x128xf32, #tpu.memory_space<vmem>>, %arg3: memref<8x128xf32, #tpu.memory_space<vmem>>, %arg4: memref<8x1xf32, #tpu.memory_space<vmem>>) attributes {dimension_semantics = [#tpu.dimension_semantics<parallel>], iteration_bounds = array<i64: 2>, scalar_prefetch = 0 : i64, scratch_operands = 0 : i64, tpu.core_type = #tpu.core_type<tc>, window_params = [{transform_indices = @transform_0, window_bounds = array<i64: 8, 2>}, {pipeline_mode = #tpu.pipeline_mode<synchronous>, transform_indices = @transform_1, window_bounds = array<i64: 128, 128>}, {transform_indices = @transform_2, window_bounds = array<i64: 8, 128>}, {transform_indices = @transform_3, window_bounds = array<i64: 8, 1>}]} {
    %c0 = arith.constant 0 : index
    %c0_0 = arith.constant 0 : index
    %0 = vector.load %arg1[%c0, %c0_0] : memref<8x2xi32, #tpu.memory_space<vmem>>, vector<8x1xi32>
    %c0_1 = arith.constant 0 : index
    %c0_2 = arith.constant 0 : index
    %1 = vector.load %arg2[%c0_1, %c0_2] : memref<128x128xf32, #tpu.memory_space<vmem>>, vector<128x128xf32>
    %2 = tpu.iota {dimensions = array<i32: 1>} : vector<8x128xi32>
    %3 = vector.broadcast %0 : vector<8x1xi32> to vector<8x128xi32>
    %4 = arith.cmpi eq, %2, %3 : vector<8x128xi32>
    %5 = arith.extui %4 : vector<8x128xi1> to vector<8x128xi32>
    %6 = arith.sitofp %5 : vector<8x128xi32> to vector<8x128xf32>
    %cst = arith.constant dense<0.000000e+00> : vector<8x128xf32>
    %7 = tpu.matmul %6, %1, %cst {dimension_numbers = #tpu.dot_dimension_numbers<[1], [0], [0], [1], [0, 0, 1, 1], [], []>, precision = #tpu.contract_precision<fp32>} : vector<8x128xf32>, vector<128x128xf32>, vector<8x128xf32> -> vector<8x128xf32>
    %c0_3 = arith.constant 0 : index
    %c0_4 = arith.constant 0 : index
    %8 = vector.load %arg3[%c0_3, %c0_4] : memref<8x128xf32, #tpu.memory_space<vmem>>, vector<8x128xf32>
    tpu.vector_store %arg3[%c0_3, %c0_4], %7 {strides = array<i32>} : memref<8x128xf32, #tpu.memory_space<vmem>>, vector<8x128xf32>,
    %c0_5 = arith.constant 0 : index
    %c1 = arith.constant 1 : index
    %9 = vector.load %arg1[%c0_5, %c1] : memref<8x2xi32, #tpu.memory_space<vmem>>, vector<8x1xi32>
    %10 = tpu.iota {dimensions = array<i32: 0>} : vector<8x1xi32>
    %c8_i32 = arith.constant 8 : i32
    %11 = arith.muli %arg0, %c8_i32 : i32
    %12 = vector.broadcast %11 : i32 to vector<8x1xi32>
    %13 = arith.addi %10, %12 : vector<8x1xi32>
    %c16_i32 = arith.constant 16 : i32
    %14 = vector.broadcast %c16_i32 : i32 to vector<8x1xi32>
    %15 = arith.cmpi slt, %13, %14 : vector<8x1xi32>
    %cst_6 = arith.constant dense<0xFF800000> : vector<8xf32>
    %16 = vector.multi_reduction <maximumf>, %7, %cst_6 [1] : vector<8x128xf32> to vector<8xf32>
    %17 = vector.shape_cast %16 : vector<8xf32> to vector<8x1xf32>
    %18 = vector.broadcast %17 : vector<8x1xf32> to vector<8x128xf32>
    %19 = arith.subf %7, %18 : vector<8x128xf32>
    %20 = math.exp %19 : vector<8x128xf32>
    %cst_7 = arith.constant dense<0.000000e+00> : vector<8xf32>
    %21 = vector.multi_reduction <add>, %20, %cst_7 [1] : vector<8x128xf32> to vector<8xf32>
    %22 = vector.shape_cast %21 : vector<8xf32> to vector<8x1xf32>
    %23 = math.log %22 : vector<8x1xf32>
    %24 = arith.addf %17, %23 : vector<8x1xf32>
    %25 = vector.broadcast %9 : vector<8x1xi32> to vector<8x128xi32>
    %26 = arith.cmpi eq, %2, %25 : vector<8x128xi32>
    %cst_8 = arith.constant 0.000000e+00 : f32
    %27 = vector.broadcast %cst_8 : f32 to vector<8x128xf32>
    %28 = arith.select %26, %7, %27 : vector<8x128xi1>, vector<8x128xf32>
    %cst_9 = arith.constant dense<0.000000e+00> : vector<8xf32>
    %29 = vector.multi_reduction <add>, %28, %cst_9 [1] : vector<8x128xf32> to vector<8xf32>
    %30 = vector.shape_cast %29 : vector<8xf32> to vector<8x1xf32>
    %31 = arith.subf %24, %30 : vector<8x1xf32>
    %cst_10 = arith.constant 0.000000e+00 : f32
    %32 = vector.broadcast %cst_10 : f32 to vector<8x1xf32>
    %33 = arith.select %15, %31, %32 : vector<8x1xi1>, vector<8x1xf32>
    %c0_11 = arith.constant 0 : index
    %c0_12 = arith.constant 0 : index
    %34 = vector.load %arg4[%c0_11, %c0_12] : memref<8x1xf32, #tpu.memory_space<vmem>>, vector<8x1xf32>
    tpu.vector_store %arg4[%c0_11, %c0_12], %33 {strides = array<i32>} : memref<8x1xf32, #tpu.memory_space<vmem>>, vector<8x1xf32>,
    return
  }
  func.func @transform_0(%arg0: i32) -> (i32, i32) {
    %c0_i32 = arith.constant 0 : i32
    %c0_i32_0 = arith.constant 0 : i32
    return %arg0, %c0_i32 : i32, i32
  }
  func.func @transform_1(%arg0: i32) -> (i32, i32) {
    %c0_i32 = arith.constant 0 : i32
    %c0_i32_0 = arith.constant 0 : i32
    %c0_i32_1 = arith.constant 0 : i32
    return %c0_i32, %c0_i32_0 : i32, i32
  }
  func.func @transform_2(%arg0: i32) -> (i32, i32) {
    %c0_i32 = arith.constant 0 : i32
    %c0_i32_0 = arith.constant 0 : i32
    return %arg0, %c0_i32 : i32, i32
  }
  func.func @transform_3(%arg0: i32) -> (i32, i32) {
    %c0_i32 = arith.constant 0 : i32
    %c0_i32_0 = arith.constant 0 : i32
    return %arg0, %c0_i32 : i32, i32
  }
}

</mosaic_0001>

<llo_original>
// kernel: tpu_custom_call.1
$region0: #{tpu_custom_call.1}
  #allocation0 [shape = 'u32[]', space=smem, size = 0x4, offset = 0x4, fixed_abs, tag = 'smem constant byte address 0x4 - core index']
  #allocation1 [shape = 'u32[72,128]{1,0:T(1,128)}', space=vmem, size = 0x9000, scoped, tag = 'internal scratch']
  %s0 = inlined_call_operand.vmem [shape: s32[16,2], index: 0, kind: input, shape index: {}]
  %s1 = inlined_call_operand.hbm [shape: f32[128,128], index: 1, kind: input, shape index: {}]
  %s2 = inlined_call_operand.hbm [shape: f32[16,128], index: 2, kind: output, shape index: {0}]
  %s3 = inlined_call_operand.vmem [shape: f32[16,1], index: 3, kind: output, shape index: {1}]
  %4 = xla_tuple %s2, %s3
  %s5 = sld [smem:[#allocation0]]
  $region53: #{tpu_custom_call.1} parent=0
    _
  %s7 = ssub.s32 1, %s5
  %s8 = scalar_select 0, %s7, %s5
  $region1: #{tpu_custom_call.1} parent=0
    #allocation2 [shape = 'u8[65536]{0}', space=vmem, size = 0x10000, scoped, tag = 'input window, operand 1, single buffered']
    #allocation3 [shape = 's32[2]{0}', space=sflag, size = 0x8, scoped, tag = 'scoped memory for tpu_custom_call.1']
    #allocation4 [shape = 's32[2]{0}', space=sflag, size = 0x8, scoped, tag = 'scoped memory for tpu_custom_call.1']
    #allocation5 [shape = 'u8[8192]{0}', space=vmem, size = 0x2000, scoped, tag = 'output window, operand 0']
    %9 = vsyncpa [#allocation3], 0
    %10 = vsyncpa [#allocation4], 0
    %s11 = scalar_lea.sflag [#allocation4], 1
    %12 = vsyncpa %s11, 0
    loop: start=0, step=1, limit=4
    $region2: #{tpu_custom_call.1} parent=1 // loop_pre_header
      _
    $region3: #{tpu_custom_call.1} parent=1 // loop_header
      %s14 = sphi 0, %s18
      %p15 = scmp.ge.s32.totalorder %s14, 4
      %s24 = sphi 0, %s26
      %s27 = sphi 0, %s24
      %s28 = sphi 0, %s27
      %s44 = sphi 0, %s28
      %s48 = sphi 0, %s48
      %s50 = sphi 0, %s48
      %s51 = sphi 0, %s50
      %s65 = sphi 0, %s51
      %s71 = sphi 0, %s73
      %s74 = sphi 0, %s71
      %s75 = sphi 0, %s74
      %s91 = sphi 0, %s75
      %s97 = sphi 0, %s99
      %s100 = sphi 0, %s97
      %s101 = sphi 0, %s100
      %s117 = sphi 0, %s101
    $region4: #{tpu_custom_call.1} parent=1 // loop_header_branch
      %17 = sbr.rel (%p15) target = $region8
    $region5: #{tpu_custom_call.1} parent=1 // loop_body
      %s19 = ssub.s32 %s14, 1
      %s20 = ssub.s32 %s14, 2
      %s21 = sadd.s32 %s14, 1
      %s22 = ssub.s32 %s14, %s21
      %p23 = scmp.eq.s32.totalorder %s22, 0
      %s25 = sadd.s32 %s24, 1
      %s26 = scalar_select %p23, %s24, %s25
      %p29 = pneg %p23
      %p30 = scmp.eq.s32.totalorder %s14, 1
      %p31 = por %p29, %p30
      %p32 = scmp.ne.s32.totalorder %s24, %s27
      %p33 = scmp.eq.s32.totalorder %s14, 0
      %p34 = por %p32, %p33
      %p35 = scmp.ne.s32.totalorder %s24, %s27
      %p36 = scmp.eq.s32.totalorder %s19, 1
      %p37 = por %p35, %p36
      %p38 = scmp.ne.s32.totalorder %s27, %s28
      %p39 = scmp.eq.s32.totalorder %s19, 0
      %p40 = por %p38, %p39
      %p41 = scmp.ne.s32.totalorder %s27, %s28
      %p42 = scmp.eq.s32.totalorder %s20, 1
      %p43 = por %p41, %p42
      %p45 = scmp.ne.s32.totalorder %s28, %s44
      %p46 = scmp.eq.s32.totalorder %s20, 0
      %p47 = por %p45, %p46
      %s49 = sadd.s32 %s48, 1
      %p52 = scmp.eq.s32.totalorder %s14, 1
      %p53 = scmp.ne.s32.totalorder %s48, %s50
      %p54 = scmp.eq.s32.totalorder %s14, 0
      %p55 = por %p53, %p54
      %p56 = scmp.ne.s32.totalorder %s48, %s50
      %p57 = scmp.eq.s32.totalorder %s19, 1
      %p58 = por %p56, %p57
      %p59 = scmp.ne.s32.totalorder %s50, %s51
      %p60 = scmp.eq.s32.totalorder %s19, 0
      %p61 = por %p59, %p60
      %p62 = scmp.ne.s32.totalorder %s50, %s51
      %p63 = scmp.eq.s32.totalorder %s20, 1
      %p64 = por %p62, %p63
      %p66 = scmp.ne.s32.totalorder %s51, %s65
      %p67 = scmp.eq.s32.totalorder %s20, 0
      %p68 = por %p66, %p67
      %s69 = ssub.s32 %s14, %s21
      %p70 = scmp.eq.s32.totalorder %s69, 0
      %s72 = sadd.s32 %s71, 1
      %s73 = scalar_select %p70, %s71, %s72
      %p76 = pneg %p70
      %p77 = scmp.eq.s32.totalorder %s14, 1
      %p78 = por %p76, %p77
      %p79 = scmp.ne.s32.totalorder %s71, %s74
      %p80 = scmp.eq.s32.totalorder %s14, 0
      %p81 = por %p79, %p80
      %p82 = scmp.ne.s32.totalorder %s71, %s74
      %p83 = scmp.eq.s32.totalorder %s19, 1
      %p84 = por %p82, %p83
      %p85 = scmp.ne.s32.totalorder %s74, %s75
      %p86 = scmp.eq.s32.totalorder %s19, 0
      %p87 = por %p85, %p86
      %p88 = scmp.ne.s32.totalorder %s74, %s75
      %p89 = scmp.eq.s32.totalorder %s20, 1
      %p90 = por %p88, %p89
      %p92 = scmp.ne.s32.totalorder %s75, %s91
      %p93 = scmp.eq.s32.totalorder %s20, 0
      %p94 = por %p92, %p93
      %s95 = ssub.s32 %s14, %s21
      %p96 = scmp.eq.s32.totalorder %s95, 0
      %s98 = sadd.s32 %s97, 1
      %s99 = scalar_select %p96, %s97, %s98
      %p102 = pneg %p96
      %p103 = scmp.eq.s32.totalorder %s14, 1
      %p104 = por %p102, %p103
      %p105 = scmp.ne.s32.totalorder %s97, %s100
      %p106 = scmp.eq.s32.totalorder %s14, 0
      %p107 = por %p105, %p106
      %p108 = scmp.ne.s32.totalorder %s97, %s100
      %p109 = scmp.eq.s32.totalorder %s19, 1
      %p110 = por %p108, %p109
      %p111 = scmp.ne.s32.totalorder %s100, %s101
      %p112 = scmp.eq.s32.totalorder %s19, 0
      %p113 = por %p111, %p112
      %p114 = scmp.ne.s32.totalorder %s100, %s101
      %p115 = scmp.eq.s32.totalorder %s20, 1
      %p116 = por %p114, %p115
      %p118 = scmp.ne.s32.totalorder %s101, %s117
      %p119 = scmp.eq.s32.totalorder %s20, 0
      %p120 = por %p118, %p119
      %p121 = scmp.le.s32.totalorder 1, %s14
      %p122 = scmp.lt.s32.totalorder %s14, 3
      %p123 = pnand %p121, %p122
      %p124 = pneg %p123
      // Predicated region
      $region9: #{tpu_custom_call.1} parent=5 // pred_check
        _
      $region10: #{tpu_custom_call.1} parent=5 // pred_check_branch
        %126 = sbr.rel (%p123) target = $region12
      $region11: #{tpu_custom_call.1} parent=5 // pred_region
        %s127 = ssub.s32 %s14, 1
        // Predicated region
        $region13: #{tpu_custom_call.1} parent=11 // pred_check
          %p128 = pneg %p61
        $region14: #{tpu_custom_call.1} parent=11 // pred_check_branch
          %130 = sbr.rel (%p128) target = $region16
        $region15: #{tpu_custom_call.1} parent=11 // pred_region
          %132 = vsyncadd [#allocation3], 0
          %s133 = sshll.u32 %s1, 4
          %s134 = int_to_ptr.hbm [resolvable:$true] %s133
          %s135 = sshll.u32 [#allocation2], 4
          %s136 = int_to_ptr.vmem [resolvable:$true] %s135
          %141 = dma.hbm_to_vmem [thread:$0]  %s134, 2048, %s136, [#allocation3], 128, 128, 8
        $region16: #{tpu_custom_call.1} parent=11 // pred_fallthru
          _
      $region12: #{tpu_custom_call.1} parent=5 // pred_fallthru
        _
      %p142 = scmp.lt.s32.totalorder %s14, 2
      // Predicated region
      $region17: #{tpu_custom_call.1} parent=5 // pred_check
        %p143 = pneg %p142
      $region18: #{tpu_custom_call.1} parent=5 // pred_check_branch
        %145 = sbr.rel (%p143) target = $region20
      $region19: #{tpu_custom_call.1} parent=5 // pred_region
        // Predicated region
        $region21: #{tpu_custom_call.1} parent=19 // pred_check
          %p146 = pneg %p34
        $region22: #{tpu_custom_call.1} parent=19 // pred_check_branch
          %148 = sbr.rel (%p146) target = $region24
        $region23: #{tpu_custom_call.1} parent=19 // pred_region
          %p149 = scmp.lt.s32.totalorder %s14, 1
          %s150 = scalar_select %p149, %s14, 1
          %s151 = smul.addr %s150, 8
          %s152 = scalar_lea.vmem %s0, %s151
        $region24: #{tpu_custom_call.1} parent=19 // pred_fallthru
          _
      $region20: #{tpu_custom_call.1} parent=5 // pred_fallthru
        _
      %p153 = scmp.le.s32.totalorder 1, %s14
      %p154 = scmp.lt.s32.totalorder %s14, 3
      %p155 = pnand %p153, %p154
      %p156 = pneg %p155
      // Predicated region
      $region25: #{tpu_custom_call.1} parent=5 // pred_check
        _
      $region26: #{tpu_custom_call.1} parent=5 // pred_check_branch
        %158 = sbr.rel (%p155) target = $region28
      $region27: #{tpu_custom_call.1} parent=5 // pred_region
        %s159 = ssub.s32 %s14, 1
        // Predicated region
        $region29: #{tpu_custom_call.1} parent=27 // pred_check
          %p160 = pneg %p61
        $region30: #{tpu_custom_call.1} parent=27 // pred_check_branch
          %162 = sbr.rel (%p160) target = $region32
        $region31: #{tpu_custom_call.1} parent=27 // pred_region
          %164 = dma.done [#allocation3], 2048
        $region32: #{tpu_custom_call.1} parent=27 // pred_fallthru
          _
        %p165 = scmp.lt.s32.totalorder %s19, 1
        %s166 = scalar_select %p165, %s19, 1
        %s167 = smul.addr %s166, 8
        %s168 = scalar_lea.vmem %s0, %s167
        %p169 = pneg %p40
        %p170 = pneg %p37
        %p171 = pneg %p61
        %p172 = pneg %p58
        %p173 = pneg %p87
        %p174 = pneg %p84
        %s175 = sand.u32 %s74, 1
        %s176 = scalar_lea.sflag [#allocation4], %s175
        %s177 = sand.u32 %s74, 1
        %s178 = smul.addr %s177, 8
        %s179 = scalar_lea.vmem [#allocation5], %s178
        %p180 = pneg %p113
        %p181 = pneg %p110
        %p182 = scmp.lt.s32.totalorder %s19, 1
        %s183 = scalar_select %p182, %s19, 1
        %s184 = smul.addr %s183, 8
        %s185 = scalar_lea.vmem %s3, %s184
        %p186 = scmp.lt.s32.totalorder %s19, 1
        %s187 = scalar_select %p186, %s19, 1
        %s188 = smul.addr %s187, 8
        %s189 = scalar_lea.vmem %s0, %s188
        %p190 = scmp.lt.s32.totalorder %s19, 1
        %s191 = scalar_select %p190, %s19, 1
        %s192 = smul.addr %s191, 8
        %s193 = scalar_lea.vmem %s3, %s192
        %v194 = vld [vmem:[%s189] sm:$0xff]
        %v195 = vld [vmem:[#allocation2] sm:$0xff]
        %v196 = vld [vmem:[#allocation2 + $0x8] sm:$0xff]
        %v197 = vld [vmem:[#allocation2 + $0x10] sm:$0xff]
        %v198 = vld [vmem:[#allocation2 + $0x18] sm:$0xff]
        %v199 = vld [vmem:[#allocation2 + $0x20] sm:$0xff]
        %v200 = vld [vmem:[#allocation2 + $0x28] sm:$0xff]
        %v201 = vld [vmem:[#allocation2 + $0x30] sm:$0xff]
        %v202 = vld [vmem:[#allocation2 + $0x38] sm:$0xff]
        %v203 = vld [vmem:[#allocation2 + $0x40] sm:$0xff]
        %v204 = vld [vmem:[#allocation2 + $0x48] sm:$0xff]
        %v205 = vld [vmem:[#allocation2 + $0x50] sm:$0xff]
        %v206 = vld [vmem:[#allocation2 + $0x58] sm:$0xff]
        %v207 = vld [vmem:[#allocation2 + $0x60] sm:$0xff]
        %v208 = vld [vmem:[#allocation2 + $0x68] sm:$0xff]
        %v209 = vld [vmem:[#allocation2 + $0x70] sm:$0xff]
        %v210 = vld [vmem:[#allocation2 + $0x78] sm:$0xff]
        %v211 = vlaneseq
        %v212 = vand.u32 %v211, 127
        %213 = vset.pattern.permute.xlu0 0
        %214 = vperm.xlu0 %213, %v194
        %v215 = vpop.permute.xlu0 %214
        %vm216 = vcmp.eq.s32.totalorder %v212, %v215
        %v217 = vsel %vm216, 1, 0
        %v218 = vcvt.s32.f32 %v217
        %v219 = vand.u32 %v210, 4294901760
        %220 = vmatpush.msra.mxu0 %v219
        %v221 = vand.u32 %v209, 4294901760
        %222 = vmatpush.msra.mxu0 %v221
        %v223 = vand.u32 %v208, 4294901760
        %224 = vmatpush.msra.mxu0 %v223
        %v225 = vand.u32 %v207, 4294901760
        %226 = vmatpush.msra.mxu0 %v225
        %v227 = vand.u32 %v206, 4294901760
        %228 = vmatpush.msra.mxu0 %v227
        %v229 = vand.u32 %v205, 4294901760
        %230 = vmatpush.msra.mxu0 %v229
        %v231 = vand.u32 %v204, 4294901760
        %232 = vmatpush.msra.mxu0 %v231
        %v233 = vand.u32 %v203, 4294901760
        %234 = vmatpush.msra.mxu0 %v233
        %v235 = vand.u32 %v202, 4294901760
        %236 = vmatpush.msra.mxu0 %v235
        %v237 = vand.u32 %v201, 4294901760
        %238 = vmatpush.msra.mxu0 %v237
        %v239 = vand.u32 %v200, 4294901760
        %240 = vmatpush.msra.mxu0 %v239
        %v241 = vand.u32 %v199, 4294901760
        %242 = vmatpush.msra.mxu0 %v241
        %v243 = vand.u32 %v198, 4294901760
        %244 = vmatpush.msra.mxu0 %v243
        %v245 = vand.u32 %v197, 4294901760
        %246 = vmatpush.msra.mxu0 %v245
        %v247 = vand.u32 %v196, 4294901760
        %248 = vmatpush.msra.mxu0 %v247
        %v249 = vand.u32 %v195, 4294901760
        %250 = vmatpush.msra.mxu0 %v249
        %v251 = vand.u32 %v218, 4294901760
        %v252 = vsub.f32 %v218, %v251
        %v253 = vand.u32 %v252, 4294901760
        %v254 = vsub.f32 %v252, %v253
        %v255 = vand.u32 %v254, 4294901760
        %256 = vmatmul.f32.gmra.mxu0 %v255
        %v257 = vpop.f32.mrf.mxu0
        %v258 = vadd.f32 0.0, %v257
        %259 = vdwg.mxu0
        %v260 = vand.u32 %v210, 4294901760
        %v261 = vsub.f32 %v210, %v260
        %v262 = vand.u32 %v261, 4294901760
        %v263 = vsub.f32 %v261, %v262
        %v264 = vand.u32 %v263, 4294901760
        %265 = vmatpush.msra.mxu0 %v264
        %v266 = vand.u32 %v209, 4294901760
        %v267 = vsub.f32 %v209, %v266
        %v268 = vand.u32 %v267, 4294901760
        %v269 = vsub.f32 %v267, %v268
        %v270 = vand.u32 %v269, 4294901760
        %271 = vmatpush.msra.mxu0 %v270
        %v272 = vand.u32 %v208, 4294901760
        %v273 = vsub.f32 %v208, %v272
        %v274 = vand.u32 %v273, 4294901760
        %v275 = vsub.f32 %v273, %v274
        %v276 = vand.u32 %v275, 4294901760
        %277 = vmatpush.msra.mxu0 %v276
        %v278 = vand.u32 %v207, 4294901760
        %v279 = vsub.f32 %v207, %v278
        %v280 = vand.u32 %v279, 4294901760
        %v281 = vsub.f32 %v279, %v280
        %v282 = vand.u32 %v281, 4294901760
        %283 = vmatpush.msra.mxu0 %v282
        %v284 = vand.u32 %v206, 4294901760
        %v285 = vsub.f32 %v206, %v284
        %v286 = vand.u32 %v285, 4294901760
        %v287 = vsub.f32 %v285, %v286
        %v288 = vand.u32 %v287, 4294901760
        %289 = vmatpush.msra.mxu0 %v288
        %v290 = vand.u32 %v205, 4294901760
        %v291 = vsub.f32 %v205, %v290
        %v292 = vand.u32 %v291, 4294901760
        %v293 = vsub.f32 %v291, %v292
        %v294 = vand.u32 %v293, 4294901760
        %295 = vmatpush.msra.mxu0 %v294
        %v296 = vand.u32 %v204, 4294901760
        %v297 = vsub.f32 %v204, %v296
        %v298 = vand.u32 %v297, 4294901760
        %v299 = vsub.f32 %v297, %v298
        %v300 = vand.u32 %v299, 4294901760
        %301 = vmatpush.msra.mxu0 %v300
        %v302 = vand.u32 %v203, 4294901760
        %v303 = vsub.f32 %v203, %v302
        %v304 = vand.u32 %v303, 4294901760
        %v305 = vsub.f32 %v303, %v304
        %v306 = vand.u32 %v305, 4294901760
        %307 = vmatpush.msra.mxu0 %v306
        %v308 = vand.u32 %v202, 4294901760
        %v309 = vsub.f32 %v202, %v308
        %v310 = vand.u32 %v309, 4294901760
        %v311 = vsub.f32 %v309, %v310
        %v312 = vand.u32 %v311, 4294901760
        %313 = vmatpush.msra.mxu0 %v312
        %v314 = vand.u32 %v201, 4294901760
        %v315 = vsub.f32 %v201, %v314
        %v316 = vand.u32 %v315, 4294901760
        %v317 = vsub.f32 %v315, %v316
        %v318 = vand.u32 %v317, 4294901760
        %319 = vmatpush.msra.mxu0 %v318
        %v320 = vand.u32 %v200, 4294901760
        %v321 = vsub.f32 %v200, %v320
        %v322 = vand.u32 %v321, 4294901760
        %v323 = vsub.f32 %v321, %v322
        %v324 = vand.u32 %v323, 4294901760
        %325 = vmatpush.msra.mxu0 %v324
        %v326 = vand.u32 %v199, 4294901760
        %v327 = vsub.f32 %v199, %v326
        %v328 = vand.u32 %v327, 4294901760
        %v329 = vsub.f32 %v327, %v328
        %v330 = vand.u32 %v329, 4294901760
        %331 = vmatpush.msra.mxu0 %v330
        %v332 = vand.u32 %v198, 4294901760
        %v333 = vsub.f32 %v198, %v332
        %v334 = vand.u32 %v333, 4294901760
        %v335 = vsub.f32 %v333, %v334
        %v336 = vand.u32 %v335, 4294901760
        %337 = vmatpush.msra.mxu0 %v336
        %v338 = vand.u32 %v197, 4294901760
        %v339 = vsub.f32 %v197, %v338
        %v340 = vand.u32 %v339, 4294901760
        %v341 = vsub.f32 %v339, %v340
        %v342 = vand.u32 %v341, 4294901760
        %343 = vmatpush.msra.mxu0 %v342
        %v344 = vand.u32 %v196, 4294901760
        %v345 = vsub.f32 %v196, %v344
        %v346 = vand.u32 %v345, 4294901760
        %v347 = vsub.f32 %v345, %v346
        %v348 = vand.u32 %v347, 4294901760
        %349 = vmatpush.msra.mxu0 %v348
        %v350 = vand.u32 %v195, 4294901760
        %v351 = vsub.f32 %v195, %v350
        %v352 = vand.u32 %v351, 4294901760
        %v353 = vsub.f32 %v351, %v352
        %v354 = vand.u32 %v353, 4294901760
        %355 = vmatpush.msra.mxu0 %v354
        %v356 = vand.u32 %v218, 4294901760
        %357 = vmatmul.f32.gmra.mxu0 %v356
        %v358 = vpop.f32.mrf.mxu0
        %v359 = vadd.f32 %v258, %v358
        %360 = vdwg.mxu0
        %v361 = vand.u32 %v210, 4294901760
        %v362 = vsub.f32 %v210, %v361
        %363 = vmatpush.msra.mxu0 %v362
        %v364 = vand.u32 %v209, 4294901760
        %v365 = vsub.f32 %v209, %v364
        %366 = vmatpush.msra.mxu0 %v365
        %v367 = vand.u32 %v208, 4294901760
        %v368 = vsub.f32 %v208, %v367
        %369 = vmatpush.msra.mxu0 %v368
        %v370 = vand.u32 %v207, 4294901760
        %v371 = vsub.f32 %v207, %v370
        %372 = vmatpush.msra.mxu0 %v371
        %v373 = vand.u32 %v206, 4294901760
        %v374 = vsub.f32 %v206, %v373
        %375 = vmatpush.msra.mxu0 %v374
        %v376 = vand.u32 %v205, 4294901760
        %v377 = vsub.f32 %v205, %v376
        %378 = vmatpush.msra.mxu0 %v377
        %v379 = vand.u32 %v204, 4294901760
        %v380 = vsub.f32 %v204, %v379
        %381 = vmatpush.msra.mxu0 %v380
        %v382 = vand.u32 %v203, 4294901760
        %v383 = vsub.f32 %v203, %v382
        %384 = vmatpush.msra.mxu0 %v383
        %v385 = vand.u32 %v202, 4294901760
        %v386 = vsub.f32 %v202, %v385
        %387 = vmatpush.msra.mxu0 %v386
        %v388 = vand.u32 %v201, 4294901760
        %v389 = vsub.f32 %v201, %v388
        %390 = vmatpush.msra.mxu0 %v389
        %v391 = vand.u32 %v200, 4294901760
        %v392 = vsub.f32 %v200, %v391
        %393 = vmatpush.msra.mxu0 %v392
        %v394 = vand.u32 %v199, 4294901760
        %v395 = vsub.f32 %v199, %v394
        %396 = vmatpush.msra.mxu0 %v395
        %v397 = vand.u32 %v198, 4294901760
        %v398 = vsub.f32 %v198, %v397
        %399 = vmatpush.msra.mxu0 %v398
        %v400 = vand.u32 %v197, 4294901760
        %v401 = vsub.f32 %v197, %v400
        %402 = vmatpush.msra.mxu0 %v401
        %v403 = vand.u32 %v196, 4294901760
        %v404 = vsub.f32 %v196, %v403
        %405 = vmatpush.msra.mxu0 %v404
        %v406 = vand.u32 %v195, 4294901760
        %v407 = vsub.f32 %v195, %v406
        %408 = vmatpush.msra.mxu0 %v407
        %v409 = vand.u32 %v218, 4294901760
        %v410 = vsub.f32 %v218, %v409
        %411 = vmatmul.f32.gmra.mxu0 %v410
        %v412 = vpop.f32.mrf.mxu0
        %v413 = vadd.f32 %v359, %v412
        %414 = vdwg.mxu0
        %v415 = vand.u32 %v210, 4294901760
        %416 = vmatpush.msra.mxu0 %v415
        %v417 = vand.u32 %v209, 4294901760
        %418 = vmatpush.msra.mxu0 %v417
        %v419 = vand.u32 %v208, 4294901760
        %420 = vmatpush.msra.mxu0 %v419
        %v421 = vand.u32 %v207, 4294901760
        %422 = vmatpush.msra.mxu0 %v421
        %v423 = vand.u32 %v206, 4294901760
        %424 = vmatpush.msra.mxu0 %v423
        %v425 = vand.u32 %v205, 4294901760
        %426 = vmatpush.msra.mxu0 %v425
        %v427 = vand.u32 %v204, 4294901760
        %428 = vmatpush.msra.mxu0 %v427
        %v429 = vand.u32 %v203, 4294901760
        %430 = vmatpush.msra.mxu0 %v429
        %v431 = vand.u32 %v202, 4294901760
        %432 = vmatpush.msra.mxu0 %v431
        %v433 = vand.u32 %v201, 4294901760
        %434 = vmatpush.msra.mxu0 %v433
        %v435 = vand.u32 %v200, 4294901760
        %436 = vmatpush.msra.mxu0 %v435
        %v437 = vand.u32 %v199, 4294901760
        %438 = vmatpush.msra.mxu0 %v437
        %v439 = vand.u32 %v198, 4294901760
        %440 = vmatpush.msra.mxu0 %v439
        %v441 = vand.u32 %v197, 4294901760
        %442 = vmatpush.msra.mxu0 %v441
        %v443 = vand.u32 %v196, 4294901760
        %444 = vmatpush.msra.mxu0 %v443
        %v445 = vand.u32 %v195, 4294901760
        %446 = vmatpush.msra.mxu0 %v445
        %v447 = vand.u32 %v218, 4294901760
        %v448 = vsub.f32 %v218, %v447
        %v449 = vand.u32 %v448, 4294901760
        %450 = vmatmul.f32.gmra.mxu0 %v449
        %v451 = vpop.f32.mrf.mxu0
        %v452 = vadd.f32 %v413, %v451
        %453 = vdwg.mxu0
        %v454 = vand.u32 %v210, 4294901760
        %v455 = vsub.f32 %v210, %v454
        %v456 = vand.u32 %v455, 4294901760
        %457 = vmatpush.msra.mxu0 %v456
        %v458 = vand.u32 %v209, 4294901760
        %v459 = vsub.f32 %v209, %v458
        %v460 = vand.u32 %v459, 4294901760
        %461 = vmatpush.msra.mxu0 %v460
        %v462 = vand.u32 %v208, 4294901760
        %v463 = vsub.f32 %v208, %v462
        %v464 = vand.u32 %v463, 4294901760
        %465 = vmatpush.msra.mxu0 %v464
        %v466 = vand.u32 %v207, 4294901760
        %v467 = vsub.f32 %v207, %v466
        %v468 = vand.u32 %v467, 4294901760
        %469 = vmatpush.msra.mxu0 %v468
        %v470 = vand.u32 %v206, 4294901760
        %v471 = vsub.f32 %v206, %v470
        %v472 = vand.u32 %v471, 4294901760
        %473 = vmatpush.msra.mxu0 %v472
        %v474 = vand.u32 %v205, 4294901760
        %v475 = vsub.f32 %v205, %v474
        %v476 = vand.u32 %v475, 4294901760
        %477 = vmatpush.msra.mxu0 %v476
        %v478 = vand.u32 %v204, 4294901760
        %v479 = vsub.f32 %v204, %v478
        %v480 = vand.u32 %v479, 4294901760
        %481 = vmatpush.msra.mxu0 %v480
        %v482 = vand.u32 %v203, 4294901760
        %v483 = vsub.f32 %v203, %v482
        %v484 = vand.u32 %v483, 4294901760
        %485 = vmatpush.msra.mxu0 %v484
        %v486 = vand.u32 %v202, 4294901760
        %v487 = vsub.f32 %v202, %v486
        %v488 = vand.u32 %v487, 4294901760
        %489 = vmatpush.msra.mxu0 %v488
        %v490 = vand.u32 %v201, 4294901760
        %v491 = vsub.f32 %v201, %v490
        %v492 = vand.u32 %v491, 4294901760
        %493 = vmatpush.msra.mxu0 %v492
        %v494 = vand.u32 %v200, 4294901760
        %v495 = vsub.f32 %v200, %v494
        %v496 = vand.u32 %v495, 4294901760
        %497 = vmatpush.msra.mxu0 %v496
        %v498 = vand.u32 %v199, 4294901760
        %v499 = vsub.f32 %v199, %v498
        %v500 = vand.u32 %v499, 4294901760
        %501 = vmatpush.msra.mxu0 %v500
        %v502 = vand.u32 %v198, 4294901760
        %v503 = vsub.f32 %v198, %v502
        %v504 = vand.u32 %v503, 4294901760
        %505 = vmatpush.msra.mxu0 %v504
        %v506 = vand.u32 %v197, 4294901760
        %v507 = vsub.f32 %v197, %v506
        %v508 = vand.u32 %v507, 4294901760
        %509 = vmatpush.msra.mxu0 %v508
        %v510 = vand.u32 %v196, 4294901760
        %v511 = vsub.f32 %v196, %v510
        %v512 = vand.u32 %v511, 4294901760
        %513 = vmatpush.msra.mxu0 %v512
        %v514 = vand.u32 %v195, 4294901760
        %v515 = vsub.f32 %v195, %v514
        %v516 = vand.u32 %v515, 4294901760
        %517 = vmatpush.msra.mxu0 %v516
        %v518 = vand.u32 %v218, 4294901760
        %519 = vmatmul.f32.gmra.mxu0 %v518
        %v520 = vpop.f32.mrf.mxu0
        %v521 = vadd.f32 %v452, %v520
        %522 = vdwg.mxu0
        %v523 = vand.u32 %v210, 4294901760
        %524 = vmatpush.msra.mxu0 %v523
        %v525 = vand.u32 %v209, 4294901760
        %526 = vmatpush.msra.mxu0 %v525
        %v527 = vand.u32 %v208, 4294901760
        %528 = vmatpush.msra.mxu0 %v527
        %v529 = vand.u32 %v207, 4294901760
        %530 = vmatpush.msra.mxu0 %v529
        %v531 = vand.u32 %v206, 4294901760
        %532 = vmatpush.msra.mxu0 %v531
        %v533 = vand.u32 %v205, 4294901760
        %534 = vmatpush.msra.mxu0 %v533
        %v535 = vand.u32 %v204, 4294901760
        %536 = vmatpush.msra.mxu0 %v535
        %v537 = vand.u32 %v203, 4294901760
        %538 = vmatpush.msra.mxu0 %v537
        %v539 = vand.u32 %v202, 4294901760
        %540 = vmatpush.msra.mxu0 %v539
        %v541 = vand.u32 %v201, 4294901760
        %542 = vmatpush.msra.mxu0 %v541
        %v543 = vand.u32 %v200, 4294901760
        %544 = vmatpush.msra.mxu0 %v543
        %v545 = vand.u32 %v199, 4294901760
        %546 = vmatpush.msra.mxu0 %v545
        %v547 = vand.u32 %v198, 4294901760
        %548 = vmatpush.msra.mxu0 %v547
        %v549 = vand.u32 %v197, 4294901760
        %550 = vmatpush.msra.mxu0 %v549
        %v551 = vand.u32 %v196, 4294901760
        %552 = vmatpush.msra.mxu0 %v551
        %v553 = vand.u32 %v195, 4294901760
        %554 = vmatpush.msra.mxu0 %v553
        %v555 = vand.u32 %v218, 4294901760
        %556 = vmatmul.f32.gmra.mxu0 %v555
        %v557 = vpop.f32.mrf.mxu0
        %v558 = vadd.f32 %v521, %v557
        %559 = vdwg.mxu0
        %560 = vst [vmem:[%s179] sm:$0xff] %v558
        %v561 = vld [vmem:[%s189] sm:$0xff]
        %v562 = vlaneseq
        %v563 = vshrl.u32 %v562, 7
        %s564 = smul.u32 %s19, 8
        %v565 = vstv %s564
        %v566 = vadd.s32 %v563, %v565
        %vm567 = vcmp.lt.s32.totalorder %v566, 16
        %568 = vmax.xlane.f32.xlu0 %v558
        %v569 = vpop.xlane.xlu0 %568
        %v570 = vsub.f32 %v558, %v569
        %v571 = vmul.f32 %v570, 1.442695
        %v572 = vpow.pop %v571
        %573 = vadd.xlane.f32.xlu0 %v572
        %v574 = vpop.xlane.xlu0 %573
        %v575 = vlog2.pop %v574
        %v576 = vmul.f32 %v575, 0.6931472
        %v577 = vadd.f32 %v569, %v576
        %578 = vset.pattern.permute.xlu0 1
        %579 = vperm.xlu0 %578, %v561
        %v580 = vpop.permute.xlu0 %579
        %vm581 = vcmp.eq.s32.totalorder %v212, %v580
        %v582 = vsel %vm581, %v558, 0.0
        %583 = vadd.xlane.f32.xlu0 %v582
        %v584 = vpop.xlane.xlu0 %583
        %v585 = vsub.f32 %v577, %v584
        %v586 = vsel %vm567, %v585, 0.0
        %vm587 = vcmask 7168
        %588 = vst.msk [vmem:[%s193] sm:$0xff] %vm587, %v586
        %s589 = sand.u32 %s74, 1
        %s590 = scalar_lea.sflag [#allocation4], %s589
        %s591 = sand.u32 %s74, 1
        %s592 = smul.addr %s591, 8
        %s593 = scalar_lea.vmem [#allocation5], %s592
        %p594 = scmp.lt.s32.totalorder %s19, 1
        %s595 = scalar_select %p594, %s19, 1
        %s596 = smul.addr %s595, 8
        %s597 = scalar_lea.vmem %s3, %s596
        // Predicated region
        $region33: #{tpu_custom_call.1} parent=27 // pred_check
          %p598 = pneg %p84
        $region34: #{tpu_custom_call.1} parent=27 // pred_check_branch
          %600 = sbr.rel (%p598) target = $region36
        $region35: #{tpu_custom_call.1} parent=27 // pred_region
          %602 = vsyncadd %s590, 0
          %s603 = smul.addr %s19, 8
          %s604 = scalar_lea.hbm %s2, %s603
          %s606 = sshll.u32 %s593, 4
          %s607 = int_to_ptr.vmem [resolvable:$true] %s606
          %s608 = sshll.u32 %s604, 4
          %s609 = int_to_ptr.hbm [resolvable:$true] %s608
          %611 = dma.vmem_to_hbm [thread:$0]  %s607, 128, %s609, %s590
        $region36: #{tpu_custom_call.1} parent=27 // pred_fallthru
          _
        // Predicated region
        $region37: #{tpu_custom_call.1} parent=27 // pred_check
          %p612 = pneg %p110
        $region38: #{tpu_custom_call.1} parent=27 // pred_check_branch
          %614 = sbr.rel (%p612) target = $region40
        $region39: #{tpu_custom_call.1} parent=27 // pred_region
          _
        $region40: #{tpu_custom_call.1} parent=27 // pred_fallthru
          _
      $region28: #{tpu_custom_call.1} parent=5 // pred_fallthru
        _
      %p615 = scmp.le.s32.totalorder 2, %s14
      // Predicated region
      $region41: #{tpu_custom_call.1} parent=5 // pred_check
        %p616 = pneg %p615
      $region42: #{tpu_custom_call.1} parent=5 // pred_check_branch
        %618 = sbr.rel (%p616) target = $region44
      $region43: #{tpu_custom_call.1} parent=5 // pred_region
        %s619 = ssub.s32 %s14, 2
        // Predicated region
        $region45: #{tpu_custom_call.1} parent=43 // pred_check
          %p620 = pneg %p90
        $region46: #{tpu_custom_call.1} parent=43 // pred_check_branch
          %622 = sbr.rel (%p620) target = $region48
        $region47: #{tpu_custom_call.1} parent=43 // pred_region
          %s623 = sand.u32 %s75, 1
          %s624 = scalar_lea.sflag [#allocation4], %s623
          %s625 = sand.u32 %s75, 1
          %s626 = smul.addr %s625, 8
          %s627 = scalar_lea.vmem [#allocation5], %s626
          %629 = dma.done %s624, 128
        $region48: #{tpu_custom_call.1} parent=43 // pred_fallthru
          _
        // Predicated region
        $region49: #{tpu_custom_call.1} parent=43 // pred_check
          %p630 = pneg %p116
        $region50: #{tpu_custom_call.1} parent=43 // pred_check_branch
          %632 = sbr.rel (%p630) target = $region52
        $region51: #{tpu_custom_call.1} parent=43 // pred_region
          %p633 = scmp.lt.s32.totalorder %s20, 1
          %s634 = scalar_select %p633, %s20, 1
          %s635 = smul.addr %s634, 8
          %s636 = scalar_lea.vmem %s3, %s635
        $region52: #{tpu_custom_call.1} parent=43 // pred_fallthru
          _
      $region44: #{tpu_custom_call.1} parent=5 // pred_fallthru
        _
    $region6: #{tpu_custom_call.1} parent=1 // loop_footer
      %s18 = sadd.s32 1, %s14
    $region7: #{tpu_custom_call.1} parent=1 // loop_footer_branch
      %13 = sbr.rel target = $region3
    $region8: #{tpu_custom_call.1} parent=1 // loop_exit
      _
    %637 = vsyncpa [#allocation3], 1
    %s638 = scalar_lea.sflag [#allocation3], 1
    %639 = vsyncpa %s638, 1
    %640 = vsyncpa [#allocation4], 1
    %s641 = scalar_lea.sflag [#allocation4], 1
    %642 = vsyncpa %s641, 1

</llo_original>
